<compile_context>
chip_gen: v7x
topology: tpu7x:2x2x1
jax: 0.10.0
libtpu: 0.0.40
codegen_flags: <defaults>
</compile_context>

<pallas_src>
import jax
import jax.numpy as jnp
import numpy as np
from jax.experimental import pallas as pl
from jax.experimental.pallas import tpu as pltpu


def _round_up(x, m):
    return ((x + m - 1) // m) * m


def trajectory_kernel(
    state_ref, prop_ref,        # row-tiled activations
    ws_ref, bs_ref,             # state_encoder
    wp_ref, bp_ref,             # proprio_encoder
    wh_ref, bh_ref,             # fused heads: [W1 | Wpp | Wr], [b1 | bpp | br]
    w2_ref, b2_ref,             # predict_action layer 2
    out_ref,                    # (tile_n, out_cols) lane-dense output slab
):
    H = ws_ref.shape[1]                    # hidden_dim
    A = w2_ref.shape[1]                    # act_dim
    out_dtype = out_ref.dtype

    # --- encoders (f32 accumulation on the MXU) ---
    h_state = jnp.dot(state_ref[...], ws_ref[...],
                      preferred_element_type=jnp.float32) + bs_ref[...]
    h_prop = jnp.dot(prop_ref[...], wp_ref[...],
                     preferred_element_type=jnp.float32) + bp_ref[...]

    # --- fused prediction heads: one wide matmul on state_emb ---
    heads = jnp.dot(h_state, wh_ref[...],
                    preferred_element_type=jnp.float32) + bh_ref[...]
    # heads columns: [ h1_pre (H) | proprio_pred (P) | return_pred (1) ]
    h1 = jnp.maximum(heads[:, :H], 0.0)                        # ReLU
    act_pred = jnp.tanh(
        jnp.dot(h1, w2_ref[...], preferred_element_type=jnp.float32) + b2_ref[...]
    )                                                          # Tanh

    # --- direct sub-slice stores into the lane-dense output block ---
    # (no concatenate: avoids XLU lane shifts and a full-slab vreg temp; the
    #  HBM writeback is still the dense 128-lane block.)
    pr = heads.shape[1] - H                # P + 1
    used = 2 * H + A + pr
    pad = out_ref.shape[1] - used

    out_ref[:, 0:H] = h_state.astype(out_dtype)
    out_ref[:, H:2 * H] = h_prop.astype(out_dtype)
    out_ref[:, 2 * H:2 * H + A] = act_pred.astype(out_dtype)
    out_ref[:, 2 * H + A:used] = heads[:, H:].astype(out_dtype)
    if pad > 0:
        out_ref[:, used:] = jnp.zeros((out_ref.shape[0], pad), out_dtype)


def trajectory_model_forward(state, proprio, params, *, tile_n=4096,
                             out_dtype=jnp.float32):
    """state: (N, obs_dims)  proprio: (N, proprio_dim)  — N = batch*seq.

    Returns (state_emb, proprio_emb, action_emb, return_emb,
             action_pred, proprio_pred, return_pred), matching the PyTorch
    embedding helpers + prediction heads (action/return embeddings are zero
    because those modalities are masked; bc_mode forces 'return' masked).
    """
    N, obs = state.shape
    H = params["ws"].shape[1]
    P = params["wp"].shape[0]          # proprio_dim
    A = params["w2"].shape[1]          # act_dim

    # Fuse head weights/biases once (host-side, negligible): [W1 | Wpp | Wr]
    wh = jnp.concatenate([params["w1"], params["wpp"], params["wr"]], axis=1)
    bh = jnp.concatenate([params["b1"], params["bpp"], params["br"]], axis=1)

    slab_cols = 2 * H + A + P + 1
    out_cols = _round_up(slab_cols, 128)     # lane-dense output width

    # Row tiling: as large as possible (amortize ~0.35us/step pipeline overhead)
    # while keeping >= 2 grid steps so dimension_semantics=("parallel",) can
    # shard rows across both TensorCores on v7x.  No host-side padding: ragged
    # last tiles are masked by Pallas.  VMEM at tile_n=4096, f32 slab is ~5 MB
    # double-buffered, comfortably inside every generation's scoped default.
    tile_n = max(8, min(tile_n, _round_up(pl.cdiv(N, 2), 8)))
    grid = (pl.cdiv(N, tile_n),)

    def row_spec(cols):
        return pl.BlockSpec((tile_n, cols), lambda i: (i, 0))

    def resident_spec(shape):
        # Constant index_map -> fetched once, stays resident across the grid.
        return pl.BlockSpec(shape, lambda i: (0,) * len(shape))

    in_arrays = [
        state, proprio,
        params["ws"], params["bs"],
        params["wp"], params["bp"],
        wh, bh,
        params["w2"], params["b2"],
    ]
    in_specs = [
        row_spec(obs),
        row_spec(P),
    ] + [resident_spec(a.shape) for a in in_arrays[2:]]

    in_bytes_row = (obs + P) * state.dtype.itemsize
    out_bytes_row = out_cols * jnp.dtype(out_dtype).itemsize
    weight_bytes = sum(int(np.prod(a.shape)) * a.dtype.itemsize
                       for a in in_arrays[2:])
    cost = pl.CostEstimate(
        flops=2 * N * (obs * H + P * H + H * (H + P + 1) + H * A),
        transcendentals=N * A,
        bytes_accessed=N * (in_bytes_row + out_bytes_row) + weight_bytes,
    )

    out_slab = pl.pallas_call(
        trajectory_kernel,
        grid=grid,
        in_specs=in_specs,
        out_specs=row_spec(out_cols),
        out_shape=jax.ShapeDtypeStruct((N, out_cols), out_dtype),
        compiler_params=pltpu.CompilerParams(
            dimension_semantics=("parallel",)),
        cost_estimate=cost,
    )(*in_arrays)

    state_emb = out_slab[:, :H]
    prop_emb = out_slab[:, H:2 * H]
    act_pred = out_slab[:, 2 * H:2 * H + A]
    prop_pred = out_slab[:, 2 * H + A:2 * H + A + P]
    ret_pred = out_slab[:, 2 * H + A + P:2 * H + A + P + 1]

    # Masked modalities ('action', and 'return' because bc_mode) with
    # impute_style='zero-embedding' -> zeros; no kernel writeback needed.
    zeros_emb = jnp.zeros((N, H), out_dtype)
    return (state_emb, prop_emb, zeros_emb, zeros_emb,
            act_pred, prop_pred, ret_pred)


def make_params(key, obs_dims, proprio_dim, act_dim, hidden_dim):
    """Deterministic synthetic parameters.  Weights are (in, out) = W_torch.T."""
    ks = jax.random.split(key, 12)

    def lin(kw, kb, fan_in, fan_out):
        bound = 1.0 / np.sqrt(fan_in)
        w = jax.random.uniform(kw, (fan_in, fan_out), jnp.float32, -bound, bound)
        b = jax.random.uniform(kb, (1, fan_out), jnp.float32, -bound, bound)
        return w, b

    p = {}
    p["ws"], p["bs"] = lin(ks[0], ks[1], obs_dims, hidden_dim)       # state_encoder
    p["wp"], p["bp"] = lin(ks[2], ks[3], proprio_dim, hidden_dim)    # proprio_encoder
    p["w1"], p["b1"] = lin(ks[4], ks[5], hidden_dim, hidden_dim)     # predict_action[0]
    p["w2"], p["b2"] = lin(ks[6], ks[7], hidden_dim, act_dim)        # predict_action[2]
    p["wpp"], p["bpp"] = lin(ks[8], ks[9], hidden_dim, proprio_dim)  # predict_proprio
    p["wr"], p["br"] = lin(ks[10], ks[11], hidden_dim, 1)            # predict_return
    return p


def reference_forward(state, proprio, p):
    h = state @ p["ws"] + p["bs"]
    hp = proprio @ p["wp"] + p["bp"]
    z = jnp.zeros_like(h)
    h1 = jnp.maximum(h @ p["w1"] + p["b1"], 0.0)
    act = jnp.tanh(h1 @ p["w2"] + p["b2"])
    prop = h @ p["wpp"] + p["bpp"]
    ret = h @ p["wr"] + p["br"]
    return h, hp, z, z, act, prop, ret


def _check(batch, seq, obs_dims, proprio_dim, act_dim, hidden_dim, seed,
           tile_n, out_dtype=jnp.float32, rtol=1e-5, atol=1e-5):
    key = jax.random.PRNGKey(seed)
    k_state, k_prop, k_params = jax.random.split(key, 3)
    N = batch * seq
    state = jax.random.normal(k_state, (N, obs_dims), jnp.float32)
    proprio = jax.random.normal(k_prop, (N, proprio_dim), jnp.float32)
    params = make_params(k_params, obs_dims, proprio_dim, act_dim, hidden_dim)

    outs = trajectory_model_forward(state, proprio, params,
                                    tile_n=tile_n, out_dtype=out_dtype)
    outs = jax.block_until_ready(outs)
    refs = reference_forward(state, proprio, params)
    for o, r in zip(outs, refs):
        np.testing.assert_allclose(np.asarray(o.astype(jnp.float32)),
                                   np.asarray(r), rtol=rtol, atol=atol)


if __name__ == "__main__":
    # Small, module-consistent shapes (full_state_mode: obs_dims is an int).
    # Test 1: tiny (N=16) -> tile_n clamps to 8, 2 grid steps.
    _check(batch=2, seq=8, obs_dims=16, proprio_dim=8, act_dim=6,
           hidden_dim=32, seed=0, tile_n=4096)
    # Test 2: multi-tile grid (N=512 -> tile_n=256, 2 grid steps).
    _check(batch=4, seq=128, obs_dims=16, proprio_dim=8, act_dim=6,
           hidden_dim=32, seed=0, tile_n=4096)
    # Test 3: ragged N (not tile-aligned) exercises Pallas OOB-masked last tile
    # without any host-side padding.
    _check(batch=3, seq=37, obs_dims=16, proprio_dim=8, act_dim=6,
           hidden_dim=32, seed=1, tile_n=4096)
    # Test 4: bf16 output storage (halved writeback traffic); compute stays f32.
    _check(batch=4, seq=128, obs_dims=16, proprio_dim=8, act_dim=6,
           hidden_dim=32, seed=0, tile_n=4096, out_dtype=jnp.bfloat16,
           rtol=2e-2, atol=2e-2)

    print("KERNEL_OK")
</pallas_src>

<mosaic_0001>
module attributes {stable_mosaic.version = 11 : i64} {
  func.func @trajectory_kernel(%arg0: i32, %arg1: memref<8x16xf32, #tpu.memory_space<vmem>>, %arg2: memref<8x8xf32, #tpu.memory_space<vmem>>, %arg3: memref<16x32xf32, #tpu.memory_space<vmem>>, %arg4: memref<1x32xf32, #tpu.memory_space<vmem>>, %arg5: memref<8x32xf32, #tpu.memory_space<vmem>>, %arg6: memref<1x32xf32, #tpu.memory_space<vmem>>, %arg7: memref<32x41xf32, #tpu.memory_space<vmem>>, %arg8: memref<1x41xf32, #tpu.memory_space<vmem>>, %arg9: memref<32x6xf32, #tpu.memory_space<vmem>>, %arg10: memref<1x6xf32, #tpu.memory_space<vmem>>, %arg11: memref<8x128xf32, #tpu.memory_space<vmem>>) attributes {dimension_semantics = [#tpu.dimension_semantics<parallel>], iteration_bounds = array<i64: 2>, scalar_prefetch = 0 : i64, scratch_operands = 0 : i64, tpu.core_type = #tpu.core_type<tc>, window_params = [{transform_indices = @transform_0, window_bounds = array<i64: 8, 16>}, {transform_indices = @transform_1, window_bounds = array<i64: 8, 8>}, {pipeline_mode = #tpu.pipeline_mode<synchronous>, transform_indices = @transform_2, window_bounds = array<i64: 16, 32>}, {pipeline_mode = #tpu.pipeline_mode<synchronous>, transform_indices = @transform_3, window_bounds = array<i64: 1, 32>}, {pipeline_mode = #tpu.pipeline_mode<synchronous>, transform_indices = @transform_4, window_bounds = array<i64: 8, 32>}, {pipeline_mode = #tpu.pipeline_mode<synchronous>, transform_indices = @transform_5, window_bounds = array<i64: 1, 32>}, {pipeline_mode = #tpu.pipeline_mode<synchronous>, transform_indices = @transform_6, window_bounds = array<i64: 32, 41>}, {pipeline_mode = #tpu.pipeline_mode<synchronous>, transform_indices = @transform_7, window_bounds = array<i64: 1, 41>}, {pipeline_mode = #tpu.pipeline_mode<synchronous>, transform_indices = @transform_8, window_bounds = array<i64: 32, 6>}, {pipeline_mode = #tpu.pipeline_mode<synchronous>, transform_indices = @transform_9, window_bounds = array<i64: 1, 6>}, {transform_indices = @transform_10, window_bounds = array<i64: 8, 128>}]} {
    %c0 = arith.constant 0 : index
    %c0_0 = arith.constant 0 : index
    %0 = vector.load %arg1[%c0, %c0_0] : memref<8x16xf32, #tpu.memory_space<vmem>>, vector<8x16xf32>
    %c0_1 = arith.constant 0 : index
    %c0_2 = arith.constant 0 : index
    %1 = vector.load %arg3[%c0_1, %c0_2] : memref<16x32xf32, #tpu.memory_space<vmem>>, vector<16x32xf32>
    %cst = arith.constant dense<0.000000e+00> : vector<8x32xf32>
    %2 = tpu.matmul %0, %1, %cst {dimension_numbers = #tpu.dot_dimension_numbers<[1], [0], [0], [1], [0, 0, 1, 1], [], []>} : vector<8x16xf32>, vector<16x32xf32>, vector<8x32xf32> -> vector<8x32xf32>
    %c0_3 = arith.constant 0 : index
    %c0_4 = arith.constant 0 : index
    %3 = vector.load %arg4[%c0_3, %c0_4] : memref<1x32xf32, #tpu.memory_space<vmem>>, vector<1x32xf32>
    %4 = vector.broadcast %3 : vector<1x32xf32> to vector<8x32xf32>
    %5 = arith.addf %2, %4 : vector<8x32xf32>
    %c0_5 = arith.constant 0 : index
    %c0_6 = arith.constant 0 : index
    %6 = vector.load %arg2[%c0_5, %c0_6] : memref<8x8xf32, #tpu.memory_space<vmem>>, vector<8x8xf32>
    %c0_7 = arith.constant 0 : index
    %c0_8 = arith.constant 0 : index
    %7 = vector.load %arg5[%c0_7, %c0_8] : memref<8x32xf32, #tpu.memory_space<vmem>>, vector<8x32xf32>
    %cst_9 = arith.constant dense<0.000000e+00> : vector<8x32xf32>
    %8 = tpu.matmul %6, %7, %cst_9 {dimension_numbers = #tpu.dot_dimension_numbers<[1], [0], [0], [1], [0, 0, 1, 1], [], []>} : vector<8x8xf32>, vector<8x32xf32>, vector<8x32xf32> -> vector<8x32xf32>
    %c0_10 = arith.constant 0 : index
    %c0_11 = arith.constant 0 : index
    %9 = vector.load %arg6[%c0_10, %c0_11] : memref<1x32xf32, #tpu.memory_space<vmem>>, vector<1x32xf32>
    %10 = vector.broadcast %9 : vector<1x32xf32> to vector<8x32xf32>
    %11 = arith.addf %8, %10 : vector<8x32xf32>
    %c0_12 = arith.constant 0 : index
    %c0_13 = arith.constant 0 : index
    %12 = vector.load %arg7[%c0_12, %c0_13] : memref<32x41xf32, #tpu.memory_space<vmem>>, vector<32x41xf32>
    %cst_14 = arith.constant dense<0.000000e+00> : vector<8x41xf32>
    %13 = tpu.matmul %5, %12, %cst_14 {dimension_numbers = #tpu.dot_dimension_numbers<[1], [0], [0], [1], [0, 0, 1, 1], [], []>} : vector<8x32xf32>, vector<32x41xf32>, vector<8x41xf32> -> vector<8x41xf32>
    %c0_15 = arith.constant 0 : index
    %c0_16 = arith.constant 0 : index
    %14 = vector.load %arg8[%c0_15, %c0_16] : memref<1x41xf32, #tpu.memory_space<vmem>>, vector<1x41xf32>
    %15 = vector.broadcast %14 : vector<1x41xf32> to vector<8x41xf32>
    %16 = arith.addf %13, %15 : vector<8x41xf32>
    %17 = vector.extract_strided_slice %16 {offsets = [0, 0], sizes = [8, 32], strides = [1, 1]} : vector<8x41xf32> to vector<8x32xf32>
    %cst_17 = arith.constant 0.000000e+00 : f32
    %18 = vector.broadcast %cst_17 : f32 to vector<8x32xf32>
    %19 = arith.maximumf %17, %18 : vector<8x32xf32>
    %c0_18 = arith.constant 0 : index
    %c0_19 = arith.constant 0 : index
    %20 = vector.load %arg9[%c0_18, %c0_19] : memref<32x6xf32, #tpu.memory_space<vmem>>, vector<32x6xf32>
    %cst_20 = arith.constant dense<0.000000e+00> : vector<8x6xf32>
    %21 = tpu.matmul %19, %20, %cst_20 {dimension_numbers = #tpu.dot_dimension_numbers<[1], [0], [0], [1], [0, 0, 1, 1], [], []>} : vector<8x32xf32>, vector<32x6xf32>, vector<8x6xf32> -> vector<8x6xf32>
    %c0_21 = arith.constant 0 : index
    %c0_22 = arith.constant 0 : index
    %22 = vector.load %arg10[%c0_21, %c0_22] : memref<1x6xf32, #tpu.memory_space<vmem>>, vector<1x6xf32>
    %23 = vector.broadcast %22 : vector<1x6xf32> to vector<8x6xf32>
    %24 = arith.addf %21, %23 : vector<8x6xf32>
    %25 = math.tanh %24 : vector<8x6xf32>
    %c0_23 = arith.constant 0 : index
    %c0_24 = arith.constant 0 : index
    %26 = vector.load %arg11[%c0_23, %c0_24] : memref<8x128xf32, #tpu.memory_space<vmem>>, vector<8x32xf32>
    tpu.vector_store %arg11[%c0_23, %c0_24], %5 {strides = array<i32>} : memref<8x128xf32, #tpu.memory_space<vmem>>, vector<8x32xf32>,
    %c0_25 = arith.constant 0 : index
    %c32 = arith.constant 32 : index
    %27 = vector.load %arg11[%c0_25, %c32] : memref<8x128xf32, #tpu.memory_space<vmem>>, vector<8x32xf32>
    tpu.vector_store %arg11[%c0_25, %c32], %11 {strides = array<i32>} : memref<8x128xf32, #tpu.memory_space<vmem>>, vector<8x32xf32>,
    %c0_26 = arith.constant 0 : index
    %c64 = arith.constant 64 : index
    %28 = vector.load %arg11[%c0_26, %c64] : memref<8x128xf32, #tpu.memory_space<vmem>>, vector<8x6xf32>
    tpu.vector_store %arg11[%c0_26, %c64], %25 {strides = array<i32>} : memref<8x128xf32, #tpu.memory_space<vmem>>, vector<8x6xf32>,
    %29 = vector.extract_strided_slice %16 {offsets = [0, 32], sizes = [8, 9], strides = [1, 1]} : vector<8x41xf32> to vector<8x9xf32>
    %c0_27 = arith.constant 0 : index
    %c70 = arith.constant 70 : index
    %30 = vector.load %arg11[%c0_27, %c70] : memref<8x128xf32, #tpu.memory_space<vmem>>, vector<8x9xf32>
    tpu.vector_store %arg11[%c0_27, %c70], %29 {strides = array<i32>} : memref<8x128xf32, #tpu.memory_space<vmem>>, vector<8x9xf32>,
    %cst_28 = arith.constant 0.000000e+00 : f32
    %31 = vector.broadcast %cst_28 : f32 to vector<8x49xf32>
    %c0_29 = arith.constant 0 : index
    %c79 = arith.constant 79 : index
    %32 = vector.load %arg11[%c0_29, %c79] : memref<8x128xf32, #tpu.memory_space<vmem>>, vector<8x49xf32>
    tpu.vector_store %arg11[%c0_29, %c79], %31 {strides = array<i32>} : memref<8x128xf32, #tpu.memory_space<vmem>>, vector<8x49xf32>,
    return
  }
  func.func @transform_0(%arg0: i32) -> (i32, i32) {
    %c0_i32 = arith.constant 0 : i32
    %c0_i32_0 = arith.constant 0 : i32
    return %arg0, %c0_i32 : i32, i32
  }
  func.func @transform_1(%arg0: i32) -> (i32, i32) {
    %c0_i32 = arith.constant 0 : i32
    %c0_i32_0 = arith.constant 0 : i32
    return %arg0, %c0_i32 : i32, i32
  }
  func.func @transform_2(%arg0: i32) -> (i32, i32) {
    %c0_i32 = arith.constant 0 : i32
    %c0_i32_0 = arith.constant 0 : i32
    %c0_i32_1 = arith.constant 0 : i32
    return %c0_i32, %c0_i32_0 : i32, i32
  }
  func.func @transform_3(%arg0: i32) -> (i32, i32) {
    %c0_i32 = arith.constant 0 : i32
    %c0_i32_0 = arith.constant 0 : i32
    %c0_i32_1 = arith.constant 0 : i32
    return %c0_i32, %c0_i32_0 : i32, i32
  }
  func.func @transform_4(%arg0: i32) -> (i32, i32) {
    %c0_i32 = arith.constant 0 : i32
    %c0_i32_0 = arith.constant 0 : i32
    %c0_i32_1 = arith.constant 0 : i32
    return %c0_i32, %c0_i32_0 : i32, i32
  }
  func.func @transform_5(%arg0: i32) -> (i32, i32) {
    %c0_i32 = arith.constant 0 : i32
    %c0_i32_0 = arith.constant 0 : i32
    %c0_i32_1 = arith.constant 0 : i32
    return %c0_i32, %c0_i32_0 : i32, i32
  }
  func.func @transform_6(%arg0: i32) -> (i32, i32) {
    %c0_i32 = arith.constant 0 : i32
    %c0_i32_0 = arith.constant 0 : i32
    %c0_i32_1 = arith.constant 0 : i32
    return %c0_i32, %c0_i32_0 : i32, i32
  }
  func.func @transform_7(%arg0: i32) -> (i32, i32) {
    %c0_i32 = arith.constant 0 : i32
    %c0_i32_0 = arith.constant 0 : i32
    %c0_i32_1 = arith.constant 0 : i32
    return %c0_i32, %c0_i32_0 : i32, i32
  }
  func.func @transform_8(%arg0: i32) -> (i32, i32) {
    %c0_i32 = arith.constant 0 : i32
    %c0_i32_0 = arith.constant 0 : i32
    %c0_i32_1 = arith.constant 0 : i32
    return %c0_i32, %c0_i32_0 : i32, i32
  }
  func.func @transform_9(%arg0: i32) -> (i32, i32) {
    %c0_i32 = arith.constant 0 : i32
    %c0_i32_0 = arith.constant 0 : i32
    %c0_i32_1 = arith.constant 0 : i32
    return %c0_i32, %c0_i32_0 : i32, i32
  }
  func.func @transform_10(%arg0: i32) -> (i32, i32) {
    %c0_i32 = arith.constant 0 : i32
    %c0_i32_0 = arith.constant 0 : i32
    return %arg0, %c0_i32 : i32, i32
  }
}

</mosaic_0001>

<llo_original>
// kernel: tpu_custom_call.1
$region0: #{tpu_custom_call.1}
  #allocation0 [shape = 'u32[]', space=smem, size = 0x4, offset = 0x4, fixed_abs, tag = 'smem constant byte address 0x4 - core index']
  #allocation1 [shape = 'u32[144,128]{1,0:T(1,128)}', space=vmem, size = 0x12000, scoped, tag = 'internal scratch']
  %s0 = inlined_call_operand.vmem [shape: f32[16,16], index: 0, kind: input, shape index: {}]
  %s1 = inlined_call_operand.vmem [shape: f32[16,8], index: 1, kind: input, shape index: {}]
  %s2 = inlined_call_operand.vmem [shape: f32[16,32], index: 2, kind: input, shape index: {}]
  %s3 = inlined_call_operand.vmem [shape: f32[1,32], index: 3, kind: input, shape index: {}]
  %s4 = inlined_call_operand.hbm [shape: f32[8,32], index: 4, kind: input, shape index: {}]
  %s5 = inlined_call_operand.vmem [shape: f32[1,32], index: 5, kind: input, shape index: {}]
  %s6 = inlined_call_operand.vmem [shape: f32[32,41], index: 6, kind: input, shape index: {}]
  %s7 = inlined_call_operand.vmem [shape: f32[1,41], index: 7, kind: input, shape index: {}]
  %s8 = inlined_call_operand.vmem [shape: f32[32,6], index: 8, kind: input, shape index: {}]
  %s9 = inlined_call_operand.vmem [shape: f32[1,6], index: 9, kind: input, shape index: {}]
  %s10 = inlined_call_operand.hbm [shape: f32[16,128], index: 10, kind: output, shape index: {}]
  %s11 = sld [smem:[#allocation0]]
  $region77: #{tpu_custom_call.1} parent=0
    _
  %s13 = ssub.s32 1, %s11
  %s14 = scalar_select 0, %s13, %s11
  $region1: #{tpu_custom_call.1} parent=0
    #allocation2 [shape = 'u8[4096]{0}', space=vmem, size = 0x1000, scoped, tag = 'input window, operand 4, single buffered']
    #allocation3 [shape = 's32[2]{0}', space=sflag, size = 0x8, scoped, tag = 'scoped memory for tpu_custom_call.1']
    #allocation4 [shape = 's32[2]{0}', space=sflag, size = 0x8, scoped, tag = 'scoped memory for tpu_custom_call.1']
    #allocation5 [shape = 'u8[8192]{0}', space=vmem, size = 0x2000, scoped, tag = 'output window, operand 0']
    %15 = vsyncpa [#allocation3], 0
    %16 = vsyncpa [#allocation4], 0
    %s17 = scalar_lea.sflag [#allocation4], 1
    %18 = vsyncpa %s17, 0
    loop: start=0, step=1, limit=4
    $region2: #{tpu_custom_call.1} parent=1 // loop_pre_header
      _
    $region3: #{tpu_custom_call.1} parent=1 // loop_header
      %s20 = sphi 0, %s24
      %p21 = scmp.ge.s32.totalorder %s20, 4
      %s30 = sphi 0, %s32
      %s33 = sphi 0, %s30
      %s34 = sphi 0, %s33
      %s50 = sphi 0, %s34
      %s56 = sphi 0, %s58
      %s59 = sphi 0, %s56
      %s60 = sphi 0, %s59
      %s76 = sphi 0, %s60
      %s80 = sphi 0, %s80
      %s82 = sphi 0, %s80
      %s83 = sphi 0, %s82
      %s97 = sphi 0, %s83
      %s101 = sphi 0, %s101
      %s103 = sphi 0, %s101
      %s104 = sphi 0, %s103
      %s118 = sphi 0, %s104
      %s122 = sphi 0, %s122
      %s124 = sphi 0, %s122
      %s125 = sphi 0, %s124
      %s139 = sphi 0, %s125
      %s143 = sphi 0, %s143
      %s145 = sphi 0, %s143
      %s146 = sphi 0, %s145
      %s160 = sphi 0, %s146
      %s164 = sphi 0, %s164
      %s166 = sphi 0, %s164
      %s167 = sphi 0, %s166
      %s181 = sphi 0, %s167
      %s185 = sphi 0, %s185
      %s187 = sphi 0, %s185
      %s188 = sphi 0, %s187
      %s202 = sphi 0, %s188
      %s206 = sphi 0, %s206
      %s208 = sphi 0, %s206
      %s209 = sphi 0, %s208
      %s223 = sphi 0, %s209
      %s227 = sphi 0, %s227
      %s229 = sphi 0, %s227
      %s230 = sphi 0, %s229
      %s244 = sphi 0, %s230
      %s250 = sphi 0, %s252
      %s253 = sphi 0, %s250
      %s254 = sphi 0, %s253
      %s270 = sphi 0, %s254
    $region4: #{tpu_custom_call.1} parent=1 // loop_header_branch
      %23 = sbr.rel (%p21) target = $region8
    $region5: #{tpu_custom_call.1} parent=1 // loop_body
      %s25 = ssub.s32 %s20, 1
      %s26 = ssub.s32 %s20, 2
      %s27 = sadd.s32 %s20, 1
      %s28 = ssub.s32 %s20, %s27
      %p29 = scmp.eq.s32.totalorder %s28, 0
      %s31 = sadd.s32 %s30, 1
      %s32 = scalar_select %p29, %s30, %s31
      %p35 = pneg %p29
      %p36 = scmp.eq.s32.totalorder %s20, 1
      %p37 = por %p35, %p36
      %p38 = scmp.ne.s32.totalorder %s30, %s33
      %p39 = scmp.eq.s32.totalorder %s20, 0
      %p40 = por %p38, %p39
      %p41 = scmp.ne.s32.totalorder %s30, %s33
      %p42 = scmp.eq.s32.totalorder %s25, 1
      %p43 = por %p41, %p42
      %p44 = scmp.ne.s32.totalorder %s33, %s34
      %p45 = scmp.eq.s32.totalorder %s25, 0
      %p46 = por %p44, %p45
      %p47 = scmp.ne.s32.totalorder %s33, %s34
      %p48 = scmp.eq.s32.totalorder %s26, 1
      %p49 = por %p47, %p48
      %p51 = scmp.ne.s32.totalorder %s34, %s50
      %p52 = scmp.eq.s32.totalorder %s26, 0
      %p53 = por %p51, %p52
      %s54 = ssub.s32 %s20, %s27
      %p55 = scmp.eq.s32.totalorder %s54, 0
      %s57 = sadd.s32 %s56, 1
      %s58 = scalar_select %p55, %s56, %s57
      %p61 = pneg %p55
      %p62 = scmp.eq.s32.totalorder %s20, 1
      %p63 = por %p61, %p62
      %p64 = scmp.ne.s32.totalorder %s56, %s59
      %p65 = scmp.eq.s32.totalorder %s20, 0
      %p66 = por %p64, %p65
      %p67 = scmp.ne.s32.totalorder %s56, %s59
      %p68 = scmp.eq.s32.totalorder %s25, 1
      %p69 = por %p67, %p68
      %p70 = scmp.ne.s32.totalorder %s59, %s60
      %p71 = scmp.eq.s32.totalorder %s25, 0
      %p72 = por %p70, %p71
      %p73 = scmp.ne.s32.totalorder %s59, %s60
      %p74 = scmp.eq.s32.totalorder %s26, 1
      %p75 = por %p73, %p74
      %p77 = scmp.ne.s32.totalorder %s60, %s76
      %p78 = scmp.eq.s32.totalorder %s26, 0
      %p79 = por %p77, %p78
      %s81 = sadd.s32 %s80, 1
      %p84 = scmp.eq.s32.totalorder %s20, 1
      %p85 = scmp.ne.s32.totalorder %s80, %s82
      %p86 = scmp.eq.s32.totalorder %s20, 0
      %p87 = por %p85, %p86
      %p88 = scmp.ne.s32.totalorder %s80, %s82
      %p89 = scmp.eq.s32.totalorder %s25, 1
      %p90 = por %p88, %p89
      %p91 = scmp.ne.s32.totalorder %s82, %s83
      %p92 = scmp.eq.s32.totalorder %s25, 0
      %p93 = por %p91, %p92
      %p94 = scmp.ne.s32.totalorder %s82, %s83
      %p95 = scmp.eq.s32.totalorder %s26, 1
      %p96 = por %p94, %p95
      %p98 = scmp.ne.s32.totalorder %s83, %s97
      %p99 = scmp.eq.s32.totalorder %s26, 0
      %p100 = por %p98, %p99
      %s102 = sadd.s32 %s101, 1
      %p105 = scmp.eq.s32.totalorder %s20, 1
      %p106 = scmp.ne.s32.totalorder %s101, %s103
      %p107 = scmp.eq.s32.totalorder %s20, 0
      %p108 = por %p106, %p107
      %p109 = scmp.ne.s32.totalorder %s101, %s103
      %p110 = scmp.eq.s32.totalorder %s25, 1
      %p111 = por %p109, %p110
      %p112 = scmp.ne.s32.totalorder %s103, %s104
      %p113 = scmp.eq.s32.totalorder %s25, 0
      %p114 = por %p112, %p113
      %p115 = scmp.ne.s32.totalorder %s103, %s104
      %p116 = scmp.eq.s32.totalorder %s26, 1
      %p117 = por %p115, %p116
      %p119 = scmp.ne.s32.totalorder %s104, %s118
      %p120 = scmp.eq.s32.totalorder %s26, 0
      %p121 = por %p119, %p120
      %s123 = sadd.s32 %s122, 1
      %p126 = scmp.eq.s32.totalorder %s20, 1
      %p127 = scmp.ne.s32.totalorder %s122, %s124
      %p128 = scmp.eq.s32.totalorder %s20, 0
      %p129 = por %p127, %p128
      %p130 = scmp.ne.s32.totalorder %s122, %s124
      %p131 = scmp.eq.s32.totalorder %s25, 1
      %p132 = por %p130, %p131
      %p133 = scmp.ne.s32.totalorder %s124, %s125
      %p134 = scmp.eq.s32.totalorder %s25, 0
      %p135 = por %p133, %p134
      %p136 = scmp.ne.s32.totalorder %s124, %s125
      %p137 = scmp.eq.s32.totalorder %s26, 1
      %p138 = por %p136, %p137
      %p140 = scmp.ne.s32.totalorder %s125, %s139
      %p141 = scmp.eq.s32.totalorder %s26, 0
      %p142 = por %p140, %p141
      %s144 = sadd.s32 %s143, 1
      %p147 = scmp.eq.s32.totalorder %s20, 1
      %p148 = scmp.ne.s32.totalorder %s143, %s145
      %p149 = scmp.eq.s32.totalorder %s20, 0
      %p150 = por %p148, %p149
      %p151 = scmp.ne.s32.totalorder %s143, %s145
      %p152 = scmp.eq.s32.totalorder %s25, 1
      %p153 = por %p151, %p152
      %p154 = scmp.ne.s32.totalorder %s145, %s146
      %p155 = scmp.eq.s32.totalorder %s25, 0
      %p156 = por %p154, %p155
      %p157 = scmp.ne.s32.totalorder %s145, %s146
      %p158 = scmp.eq.s32.totalorder %s26, 1
      %p159 = por %p157, %p158
      %p161 = scmp.ne.s32.totalorder %s146, %s160
      %p162 = scmp.eq.s32.totalorder %s26, 0
      %p163 = por %p161, %p162
      %s165 = sadd.s32 %s164, 1
      %p168 = scmp.eq.s32.totalorder %s20, 1
      %p169 = scmp.ne.s32.totalorder %s164, %s166
      %p170 = scmp.eq.s32.totalorder %s20, 0
      %p171 = por %p169, %p170
      %p172 = scmp.ne.s32.totalorder %s164, %s166
      %p173 = scmp.eq.s32.totalorder %s25, 1
      %p174 = por %p172, %p173
      %p175 = scmp.ne.s32.totalorder %s166, %s167
      %p176 = scmp.eq.s32.totalorder %s25, 0
      %p177 = por %p175, %p176
      %p178 = scmp.ne.s32.totalorder %s166, %s167
      %p179 = scmp.eq.s32.totalorder %s26, 1
      %p180 = por %p178, %p179
      %p182 = scmp.ne.s32.totalorder %s167, %s181
      %p183 = scmp.eq.s32.totalorder %s26, 0
      %p184 = por %p182, %p183
      %s186 = sadd.s32 %s185, 1
      %p189 = scmp.eq.s32.totalorder %s20, 1
      %p190 = scmp.ne.s32.totalorder %s185, %s187
      %p191 = scmp.eq.s32.totalorder %s20, 0
      %p192 = por %p190, %p191
      %p193 = scmp.ne.s32.totalorder %s185, %s187
      %p194 = scmp.eq.s32.totalorder %s25, 1
      %p195 = por %p193, %p194
      %p196 = scmp.ne.s32.totalorder %s187, %s188
      %p197 = scmp.eq.s32.totalorder %s25, 0
      %p198 = por %p196, %p197
      %p199 = scmp.ne.s32.totalorder %s187, %s188
      %p200 = scmp.eq.s32.totalorder %s26, 1
      %p201 = por %p199, %p200
      %p203 = scmp.ne.s32.totalorder %s188, %s202
      %p204 = scmp.eq.s32.totalorder %s26, 0
      %p205 = por %p203, %p204
      %s207 = sadd.s32 %s206, 1
      %p210 = scmp.eq.s32.totalorder %s20, 1
      %p211 = scmp.ne.s32.totalorder %s206, %s208
      %p212 = scmp.eq.s32.totalorder %s20, 0
      %p213 = por %p211, %p212
      %p214 = scmp.ne.s32.totalorder %s206, %s208
      %p215 = scmp.eq.s32.totalorder %s25, 1
      %p216 = por %p214, %p215
      %p217 = scmp.ne.s32.totalorder %s208, %s209
      %p218 = scmp.eq.s32.totalorder %s25, 0
      %p219 = por %p217, %p218
      %p220 = scmp.ne.s32.totalorder %s208, %s209
      %p221 = scmp.eq.s32.totalorder %s26, 1
      %p222 = por %p220, %p221
      %p224 = scmp.ne.s32.totalorder %s209, %s223
      %p225 = scmp.eq.s32.totalorder %s26, 0
      %p226 = por %p224, %p225
      %s228 = sadd.s32 %s227, 1
      %p231 = scmp.eq.s32.totalorder %s20, 1
      %p232 = scmp.ne.s32.totalorder %s227, %s229
      %p233 = scmp.eq.s32.totalorder %s20, 0
      %p234 = por %p232, %p233
      %p235 = scmp.ne.s32.totalorder %s227, %s229
      %p236 = scmp.eq.s32.totalorder %s25, 1
      %p237 = por %p235, %p236
      %p238 = scmp.ne.s32.totalorder %s229, %s230
      %p239 = scmp.eq.s32.totalorder %s25, 0
      %p240 = por %p238, %p239
      %p241 = scmp.ne.s32.totalorder %s229, %s230
      %p242 = scmp.eq.s32.totalorder %s26, 1
      %p243 = por %p241, %p242
      %p245 = scmp.ne.s32.totalorder %s230, %s244
      %p246 = scmp.eq.s32.totalorder %s26, 0
      %p247 = por %p245, %p246
      %s248 = ssub.s32 %s20, %s27
      %p249 = scmp.eq.s32.totalorder %s248, 0
      %s251 = sadd.s32 %s250, 1
      %s252 = scalar_select %p249, %s250, %s251
      %p255 = pneg %p249
      %p256 = scmp.eq.s32.totalorder %s20, 1
      %p257 = por %p255, %p256
      %p258 = scmp.ne.s32.totalorder %s250, %s253
      %p259 = scmp.eq.s32.totalorder %s20, 0
      %p260 = por %p258, %p259
      %p261 = scmp.ne.s32.totalorder %s250, %s253
      %p262 = scmp.eq.s32.totalorder %s25, 1
      %p263 = por %p261, %p262
      %p264 = scmp.ne.s32.totalorder %s253, %s254
      %p265 = scmp.eq.s32.totalorder %s25, 0
      %p266 = por %p264, %p265
      %p267 = scmp.ne.s32.totalorder %s253, %s254
      %p268 = scmp.eq.s32.totalorder %s26, 1
      %p269 = por %p267, %p268
      %p271 = scmp.ne.s32.totalorder %s254, %s270
      %p272 = scmp.eq.s32.totalorder %s26, 0
      %p273 = por %p271, %p272
      %p274 = scmp.le.s32.totalorder 1, %s20
      %p275 = scmp.lt.s32.totalorder %s20, 3
      %p276 = pnand %p274, %p275
      %p277 = pneg %p276
      // Predicated region
      $region9: #{tpu_custom_call.1} parent=5 // pred_check
        _
      $region10: #{tpu_custom_call.1} parent=5 // pred_check_branch
        %279 = sbr.rel (%p276) target = $region12
      $region11: #{tpu_custom_call.1} parent=5 // pred_region
        %s280 = ssub.s32 %s20, 1
        // Predicated region
        $region13: #{tpu_custom_call.1} parent=11 // pred_check
          %p281 = pneg %p93
        $region14: #{tpu_custom_call.1} parent=11 // pred_check_branch
          %283 = sbr.rel (%p281) target = $region16
        $region15: #{tpu_custom_call.1} parent=11 // pred_region
          _
        $region16: #{tpu_custom_call.1} parent=11 // pred_fallthru
          _
        // Predicated region
        $region17: #{tpu_custom_call.1} parent=11 // pred_check
          %p284 = pneg %p114
        $region18: #{tpu_custom_call.1} parent=11 // pred_check_branch
          %286 = sbr.rel (%p284) target = $region20
        $region19: #{tpu_custom_call.1} parent=11 // pred_region
          _
        $region20: #{tpu_custom_call.1} parent=11 // pred_fallthru
          _
        // Predicated region
        $region21: #{tpu_custom_call.1} parent=11 // pred_check
          %p287 = pneg %p135
        $region22: #{tpu_custom_call.1} parent=11 // pred_check_branch
          %289 = sbr.rel (%p287) target = $region24
        $region23: #{tpu_custom_call.1} parent=11 // pred_region
          %s291 = ssub.s32 128, 128
          %292 = vsyncadd [#allocation3], %s291
          %s294 = sshll.u32 [#allocation2], 4
          %s295 = int_to_ptr.vmem [resolvable:$true] %s294
          %297 = dma.hbm_to_vmem [thread:$0]  %s4, 128, %s295, [#allocation3]
        $region24: #{tpu_custom_call.1} parent=11 // pred_fallthru
          _
        // Predicated region
        $region25: #{tpu_custom_call.1} parent=11 // pred_check
          %p298 = pneg %p156
        $region26: #{tpu_custom_call.1} parent=11 // pred_check_branch
          %300 = sbr.rel (%p298) target = $region28
        $region27: #{tpu_custom_call.1} parent=11 // pred_region
          _
        $region28: #{tpu_custom_call.1} parent=11 // pred_fallthru
          _
        // Predicated region
        $region29: #{tpu_custom_call.1} parent=11 // pred_check
          %p301 = pneg %p177
        $region30: #{tpu_custom_call.1} parent=11 // pred_check_branch
          %303 = sbr.rel (%p301) target = $region32
        $region31: #{tpu_custom_call.1} parent=11 // pred_region
          _
        $region32: #{tpu_custom_call.1} parent=11 // pred_fallthru
          _
        // Predicated region
        $region33: #{tpu_custom_call.1} parent=11 // pred_check
          %p304 = pneg %p198
        $region34: #{tpu_custom_call.1} parent=11 // pred_check_branch
          %306 = sbr.rel (%p304) target = $region36
        $region35: #{tpu_custom_call.1} parent=11 // pred_region
          _
        $region36: #{tpu_custom_call.1} parent=11 // pred_fallthru
          _
        // Predicated region
        $region37: #{tpu_custom_call.1} parent=11 // pred_check
          %p307 = pneg %p219
        $region38: #{tpu_custom_call.1} parent=11 // pred_check_branch
          %309 = sbr.rel (%p307) target = $region40
        $region39: #{tpu_custom_call.1} parent=11 // pred_region
          _
        $region40: #{tpu_custom_call.1} parent=11 // pred_fallthru
          _
        // Predicated region
        $region41: #{tpu_custom_call.1} parent=11 // pred_check
          %p310 = pneg %p240
        $region42: #{tpu_custom_call.1} parent=11 // pred_check_branch
          %312 = sbr.rel (%p310) target = $region44
        $region43: #{tpu_custom_call.1} parent=11 // pred_region
          _
        $region44: #{tpu_custom_call.1} parent=11 // pred_fallthru
          _
      $region12: #{tpu_custom_call.1} parent=5 // pred_fallthru
        _
      %p313 = scmp.lt.s32.totalorder %s20, 2
      // Predicated region
      $region45: #{tpu_custom_call.1} parent=5 // pred_check
        %p314 = pneg %p313
      $region46: #{tpu_custom_call.1} parent=5 // pred_check_branch
        %316 = sbr.rel (%p314) target = $region48
      $region47: #{tpu_custom_call.1} parent=5 // pred_region
        // Predicated region
        $region49: #{tpu_custom_call.1} parent=47 // pred_check
          %p317 = pneg %p40
        $region50: #{tpu_custom_call.1} parent=47 // pred_check_branch
          %319 = sbr.rel (%p317) target = $region52
        $region51: #{tpu_custom_call.1} parent=47 // pred_region
          %p320 = scmp.lt.s32.totalorder %s20, 1
          %s321 = scalar_select %p320, %s20, 1
          %s322 = smul.addr %s321, 8
          %s323 = scalar_lea.vmem %s0, %s322
        $region52: #{tpu_custom_call.1} parent=47 // pred_fallthru
          _
        // Predicated region
        $region53: #{tpu_custom_call.1} parent=47 // pred_check
          %p324 = pneg %p66
        $region54: #{tpu_custom_call.1} parent=47 // pred_check_branch
          %326 = sbr.rel (%p324) target = $region56
        $region55: #{tpu_custom_call.1} parent=47 // pred_region
          %p327 = scmp.lt.s32.totalorder %s20, 1
          %s328 = scalar_select %p327, %s20, 1
          %s329 = smul.addr %s328, 8
          %s330 = scalar_lea.vmem %s1, %s329
        $region56: #{tpu_custom_call.1} parent=47 // pred_fallthru
          _
      $region48: #{tpu_custom_call.1} parent=5 // pred_fallthru
        _
      %p331 = scmp.le.s32.totalorder 1, %s20
      %p332 = scmp.lt.s32.totalorder %s20, 3
      %p333 = pnand %p331, %p332
      %p334 = pneg %p333
      // Predicated region
      $region57: #{tpu_custom_call.1} parent=5 // pred_check
        _
      $region58: #{tpu_custom_call.1} parent=5 // pred_check_branch
        %336 = sbr.rel (%p333) target = $region60
      $region59: #{tpu_custom_call.1} parent=5 // pred_region
        %s337 = ssub.s32 %s20, 1
        // Predicated region
        $region61: #{tpu_custom_call.1} parent=59 // pred_check
          %p338 = pneg %p135
        $region62: #{tpu_custom_call.1} parent=59 // pred_check_branch
          %340 = sbr.rel (%p338) target = $region64
        $region63: #{tpu_custom_call.1} parent=59 // pred_region
          %341 = dma.done [#allocation3], 128
        $region64: #{tpu_custom_call.1} parent=59 // pred_fallthru
          _
        %p342 = scmp.lt.s32.totalorder %s25, 1
        %s343 = scalar_select %p342, %s25, 1
        %s344 = smul.addr %s343, 8
        %s345 = scalar_lea.vmem %s0, %s344
        %p346 = pneg %p46
        %p347 = pneg %p43
        %p348 = scmp.lt.s32.totalorder %s25, 1
        %s349 = scalar_select %p348, %s25, 1
        %s350 = smul.addr %s349, 8
        %s351 = scalar_lea.vmem %s1, %s350
        %p352 = pneg %p72
        %p353 = pneg %p69
        %p354 = pneg %p93
        %p355 = pneg %p90
        %p356 = pneg %p114
        %p357 = pneg %p111
        %p358 = pneg %p135
        %p359 = pneg %p132
        %p360 = pneg %p156
        %p361 = pneg %p153
        %p362 = pneg %p177
        %p363 = pneg %p174
        %p364 = pneg %p198
        %p365 = pneg %p195
        %p366 = pneg %p219
        %p367 = pneg %p216
        %p368 = pneg %p240
        %p369 = pneg %p237
        %p370 = pneg %p266
        %p371 = pneg %p263
        %s372 = sand.u32 %s253, 1
        %s373 = scalar_lea.sflag [#allocation4], %s372
        %s374 = sand.u32 %s253, 1
        %s375 = smul.addr %s374, 8
        %s376 = scalar_lea.vmem [#allocation5], %s375
        %p377 = scmp.lt.s32.totalorder %s25, 1
        %s378 = scalar_select %p377, %s25, 1
        %s379 = smul.addr %s378, 8
        %s380 = scalar_lea.vmem %s0, %s379
        %p381 = scmp.lt.s32.totalorder %s25, 1
        %s382 = scalar_select %p381, %s25, 1
        %s383 = smul.addr %s382, 8
        %s384 = scalar_lea.vmem %s1, %s383
        %v385 = vld [vmem:[%s380] sm:$0xff]
        %v386 = vld [vmem:[%s2] sm:$0xff]
        %v387 = vld [vmem:[%s2 + $0x8] sm:$0xff]
        %v388 = vld [vmem:[%s3] sm:$0x1]
        %v390 = vlaneseq
        %v391 = vshrl.u32 %v390, 7
        %v392 = vsub.s32 0, %v391
        %v393 = vrot.slane %v388, %v392
        %vm395 = vcmask 130048
        %v397 = vsel %vm395, %v385, 0
        %399 = vmatprep.subr.mxu0 0.0
        %400 = vmatpush1.msra.mxu0 %v386
        %401 = vmatprep.subr.mxu0 0.0
        %402 = vmatpush1.msra.mxu0 %v387
        %403 = vmatprep.subr.mxu0 0.0
        %404 = vmatpush1.msra.mxu0 0.0
        %405 = vmatprep.subr.mxu0 0.0
        %406 = vmatpush1.msra.mxu0 0.0
        %407 = vmatprep.subr.mxu0 0.0
        %408 = vmatpush1.msra.mxu0 0.0
        %409 = vmatprep.subr.mxu0 0.0
        %410 = vmatpush1.msra.mxu0 0.0
        %411 = vmatprep.subr.mxu0 0.0
        %412 = vmatpush1.msra.mxu0 0.0
        %413 = vmatprep.subr.mxu0 0.0
        %414 = vmatpush1.msra.mxu0 0.0
        %415 = vmatprep.subr.mxu0 0.0
        %416 = vmatpush1.msra.mxu0 0.0
        %417 = vmatprep.subr.mxu0 0.0
        %418 = vmatpush1.msra.mxu0 0.0
        %419 = vmatprep.subr.mxu0 0.0
        %420 = vmatpush1.msra.mxu0 0.0
        %421 = vmatprep.subr.mxu0 0.0
        %422 = vmatpush1.msra.mxu0 0.0
        %423 = vmatprep.subr.mxu0 0.0
        %424 = vmatpush1.msra.mxu0 0.0
        %425 = vmatprep.subr.mxu0 0.0
        %426 = vmatpush1.msra.mxu0 0.0
        %427 = vmatprep.subr.mxu0 0.0
        %428 = vmatpush1.msra.mxu0 0.0
        %429 = vmatprep.subr.mxu0 0.0
        %430 = vmatpush1.msra.mxu0 0.0
        %431 = vmatprep.subr.mxu0 0.0
        %432 = vmatpush1.msra.mxu0 0.0
        %433 = vmatprep.subr.mxu0 0.0
        %434 = vmatpush1.msra.mxu0 0.0
        %435 = vmatprep.subr.mxu0 0.0
        %436 = vmatpush1.msra.mxu0 0.0
        %437 = vmatprep.subr.mxu0 0.0
        %438 = vmatpush1.msra.mxu0 0.0
        %439 = vmatprep.subr.mxu0 0.0
        %440 = vmatpush1.msra.mxu0 0.0
        %441 = vmatprep.subr.mxu0 0.0
        %442 = vmatpush1.msra.mxu0 0.0
        %443 = vmatprep.subr.mxu0 0.0
        %444 = vmatpush1.msra.mxu0 0.0
        %445 = vmatprep.subr.mxu0 0.0
        %446 = vmatpush1.msra.mxu0 0.0
        %447 = vmatprep.subr.mxu0 0.0
        %448 = vmatpush1.msra.mxu0 0.0
        %449 = vmatprep.subr.mxu0 0.0
        %450 = vmatpush1.msra.mxu0 0.0
        %451 = vmatprep.subr.mxu0 0.0
        %452 = vmatpush1.msra.mxu0 0.0
        %453 = vmatprep.subr.mxu0 0.0
        %454 = vmatpush1.msra.mxu0 0.0
        %455 = vmatprep.subr.mxu0 0.0
        %456 = vmatpush1.msra.mxu0 0.0
        %457 = vmatprep.subr.mxu0 0.0
        %458 = vmatpush1.msra.mxu0 0.0
        %459 = vmatprep.subr.mxu0 0.0
        %460 = vmatpush1.msra.mxu0 0.0
        %461 = vmatprep.subr.mxu0 0.0
        %462 = vmatpush1.msra.mxu0 0.0
        %463 = vmatprep.mubr.f32.mxu0 0.0
        %464 = vmatmul.mubr.f32.gmra.mrb[0].mxu0 %v397
        %v465 = vpop.f32.mrb[0].mxu0
        %v466 = vadd.f32 %v393, %v465
        %v467 = vpop.f32.mrb[0].mxu0
        %468 = vdwg.mxu0
        %v469 = vld [vmem:[%s384] sm:$0xff]
        %v470 = vld [vmem:[#allocation2] sm:$0xff]
        %v471 = vld [vmem:[%s5] sm:$0x1]
        %v473 = vlaneseq
        %v474 = vshrl.u32 %v473, 7
        %v475 = vsub.s32 0, %v474
        %v476 = vrot.slane %v471, %v475
        %vm478 = vcmask 64512
        %v480 = vsel %vm478, %v469, 0
        %482 = vmatprep.subr.mxu0 0.0
        %483 = vmatpush1.msra.mxu0 %v470
        %484 = vmatprep.subr.mxu0 0.0
        %485 = vmatpush1.msra.mxu0 0.0
        %486 = vmatprep.subr.mxu0 0.0
        %487 = vmatpush1.msra.mxu0 0.0
        %488 = vmatprep.subr.mxu0 0.0
        %489 = vmatpush1.msra.mxu0 0.0
        %490 = vmatprep.subr.mxu0 0.0
        %491 = vmatpush1.msra.mxu0 0.0
        %492 = vmatprep.subr.mxu0 0.0
        %493 = vmatpush1.msra.mxu0 0.0
        %494 = vmatprep.subr.mxu0 0.0
        %495 = vmatpush1.msra.mxu0 0.0
        %496 = vmatprep.subr.mxu0 0.0
        %497 = vmatpush1.msra.mxu0 0.0
        %498 = vmatprep.subr.mxu0 0.0
        %499 = vmatpush1.msra.mxu0 0.0
        %500 = vmatprep.subr.mxu0 0.0
        %501 = vmatpush1.msra.mxu0 0.0
        %502 = vmatprep.subr.mxu0 0.0
        %503 = vmatpush1.msra.mxu0 0.0
        %504 = vmatprep.subr.mxu0 0.0
        %505 = vmatpush1.msra.mxu0 0.0
        %506 = vmatprep.subr.mxu0 0.0
        %507 = vmatpush1.msra.mxu0 0.0
        %508 = vmatprep.subr.mxu0 0.0
        %509 = vmatpush1.msra.mxu0 0.0
        %510 = vmatprep.subr.mxu0 0.0
        %511 = vmatpush1.msra.mxu0 0.0
        %512 = vmatprep.subr.mxu0 0.0
        %513 = vmatpush1.msra.mxu0 0.0
        %514 = vmatprep.subr.mxu0 0.0
        %515 = vmatpush1.msra.mxu0 0.0
        %516 = vmatprep.subr.mxu0 0.0
        %517 = vmatpush1.msra.mxu0 0.0
        %518 = vmatprep.subr.mxu0 0.0
        %519 = vmatpush1.msra.mxu0 0.0
        %520 = vmatprep.subr.mxu0 0.0
        %521 = vmatpush1.msra.mxu0 0.0
        %522 = vmatprep.subr.mxu0 0.0
        %523 = vmatpush1.msra.mxu0 0.0
        %524 = vmatprep.subr.mxu0 0.0
        %525 = vmatpush1.msra.mxu0 0.0
        %526 = vmatprep.subr.mxu0 0.0
        %527 = vmatpush1.msra.mxu0 0.0
        %528 = vmatprep.subr.mxu0 0.0
        %529 = vmatpush1.msra.mxu0 0.0
        %530 = vmatprep.subr.mxu0 0.0
        %531 = vmatpush1.msra.mxu0 0.0
        %532 = vmatprep.subr.mxu0 0.0
        %533 = vmatpush1.msra.mxu0 0.0
        %534 = vmatprep.subr.mxu0 0.0
        %535 = vmatpush1.msra.mxu0 0.0
        %536 = vmatprep.subr.mxu0 0.0
        %537 = vmatpush1.msra.mxu0 0.0
        %538 = vmatprep.subr.mxu0 0.0
        %539 = vmatpush1.msra.mxu0 0.0
        %540 = vmatprep.subr.mxu0 0.0
        %541 = vmatpush1.msra.mxu0 0.0
        %542 = vmatprep.subr.mxu0 0.0
        %543 = vmatpush1.msra.mxu0 0.0
        %544 = vmatprep.subr.mxu0 0.0
        %545 = vmatpush1.msra.mxu0 0.0
        %546 = vmatprep.mubr.f32.mxu0 0.0
        %547 = vmatmul.mubr.f32.gmra.mrb[0].mxu0 %v480
        %v548 = vpop.f32.mrb[0].mxu0
        %v549 = vadd.f32 %v476, %v548
        %v550 = vpop.f32.mrb[0].mxu0
        %551 = vdwg.mxu0
        %v552 = vld [vmem:[%s6] sm:$0xff]
        %v553 = vld [vmem:[%s6 + $0x8] sm:$0xff]
        %v554 = vld [vmem:[%s6 + $0x10] sm:$0xff]
        %v555 = vld [vmem:[%s6 + $0x18] sm:$0xff]
        %v556 = vld [vmem:[%s7] sm:$0x1]
        %v558 = vlaneseq
        %v559 = vshrl.u32 %v558, 7
        %v560 = vsub.s32 0, %v559
        %v561 = vrot.slane %v556, %v560
        %vm563 = vcmask 261120
        %v565 = vsel %vm563, %v466, 0
        %567 = vmatprep.subr.mxu0 0.0
        %568 = vmatpush1.msra.mxu0 %v552
        %569 = vmatprep.subr.mxu0 0.0
        %570 = vmatpush1.msra.mxu0 %v553
        %571 = vmatprep.subr.mxu0 0.0
        %572 = vmatpush1.msra.mxu0 %v554
        %573 = vmatprep.subr.mxu0 0.0
        %574 = vmatpush1.msra.mxu0 %v555
        %575 = vmatprep.subr.mxu0 0.0
        %576 = vmatpush1.msra.mxu0 0.0
        %577 = vmatprep.subr.mxu0 0.0
        %578 = vmatpush1.msra.mxu0 0.0
        %579 = vmatprep.subr.mxu0 0.0
        %580 = vmatpush1.msra.mxu0 0.0
        %581 = vmatprep.subr.mxu0 0.0
        %582 = vmatpush1.msra.mxu0 0.0
        %583 = vmatprep.subr.mxu0 0.0
        %584 = vmatpush1.msra.mxu0 0.0
        %585 = vmatprep.subr.mxu0 0.0
        %586 = vmatpush1.msra.mxu0 0.0
        %587 = vmatprep.subr.mxu0 0.0
        %588 = vmatpush1.msra.mxu0 0.0
        %589 = vmatprep.subr.mxu0 0.0
        %590 = vmatpush1.msra.mxu0 0.0
        %591 = vmatprep.subr.mxu0 0.0
        %592 = vmatpush1.msra.mxu0 0.0
        %593 = vmatprep.subr.mxu0 0.0
        %594 = vmatpush1.msra.mxu0 0.0
        %595 = vmatprep.subr.mxu0 0.0
        %596 = vmatpush1.msra.mxu0 0.0
        %597 = vmatprep.subr.mxu0 0.0
        %598 = vmatpush1.msra.mxu0 0.0
        %599 = vmatprep.subr.mxu0 0.0
        %600 = vmatpush1.msra.mxu0 0.0
        %601 = vmatprep.subr.mxu0 0.0
        %602 = vmatpush1.msra.mxu0 0.0
        %603 = vmatprep.subr.mxu0 0.0
        %604 = vmatpush1.msra.mxu0 0.0
        %605 = vmatprep.subr.mxu0 0.0
        %606 = vmatpush1.msra.mxu0 0.0
        %607 = vmatprep.subr.mxu0 0.0
        %608 = vmatpush1.msra.mxu0 0.0
        %609 = vmatprep.subr.mxu0 0.0
        %610 = vmatpush1.msra.mxu0 0.0
        %611 = vmatprep.subr.mxu0 0.0
        %612 = vmatpush1.msra.mxu0 0.0
        %613 = vmatprep.subr.mxu0 0.0
        %614 = vmatpush1.msra.mxu0 0.0
        %615 = vmatprep.subr.mxu0 0.0
        %616 = vmatpush1.msra.mxu0 0.0
        %617 = vmatprep.subr.mxu0 0.0
        %618 = vmatpush1.msra.mxu0 0.0
        %619 = vmatprep.subr.mxu0 0.0
        %620 = vmatpush1.msra.mxu0 0.0
        %621 = vmatprep.subr.mxu0 0.0
        %622 = vmatpush1.msra.mxu0 0.0
        %623 = vmatprep.subr.mxu0 0.0
        %624 = vmatpush1.msra.mxu0 0.0
        %625 = vmatprep.subr.mxu0 0.0
        %626 = vmatpush1.msra.mxu0 0.0
        %627 = vmatprep.subr.mxu0 0.0
        %628 = vmatpush1.msra.mxu0 0.0
        %629 = vmatprep.subr.mxu0 0.0
        %630 = vmatpush1.msra.mxu0 0.0
        %631 = vmatprep.mubr.f32.mxu0 0.0
        %632 = vmatmul.mubr.f32.gmra.mrb[0].mxu0 %v565
        %v633 = vpop.f32.mrb[0].mxu0
        %v634 = vadd.f32 %v561, %v633
        %v635 = vpop.f32.mrb[0].mxu0
        %636 = vdwg.mxu0
        %v637 = vmax.f32 %v634, 0.0
        %v638 = vld [vmem:[%s8] sm:$0xff]
        %v639 = vld [vmem:[%s8 + $0x8] sm:$0xff]
        %v640 = vld [vmem:[%s8 + $0x10] sm:$0xff]
        %v641 = vld [vmem:[%s8 + $0x18] sm:$0xff]
        %v642 = vld [vmem:[%s9] sm:$0x1]
        %v644 = vlaneseq
        %v645 = vshrl.u32 %v644, 7
        %v646 = vsub.s32 0, %v645
        %v647 = vrot.slane %v642, %v646
        %v650 = vsel %vm563, %v637, 0
        %652 = vmatprep.subr.mxu0 0.0
        %653 = vmatpush1.msra.mxu0 %v638
        %654 = vmatprep.subr.mxu0 0.0
        %655 = vmatpush1.msra.mxu0 %v639
        %656 = vmatprep.subr.mxu0 0.0
        %657 = vmatpush1.msra.mxu0 %v640
        %658 = vmatprep.subr.mxu0 0.0
        %659 = vmatpush1.msra.mxu0 %v641
        %660 = vmatprep.subr.mxu0 0.0
        %661 = vmatpush1.msra.mxu0 0.0
        %662 = vmatprep.subr.mxu0 0.0
        %663 = vmatpush1.msra.mxu0 0.0
        %664 = vmatprep.subr.mxu0 0.0
        %665 = vmatpush1.msra.mxu0 0.0
        %666 = vmatprep.subr.mxu0 0.0
        %667 = vmatpush1.msra.mxu0 0.0
        %668 = vmatprep.subr.mxu0 0.0
        %669 = vmatpush1.msra.mxu0 0.0
        %670 = vmatprep.subr.mxu0 0.0
        %671 = vmatpush1.msra.mxu0 0.0
        %672 = vmatprep.subr.mxu0 0.0
        %673 = vmatpush1.msra.mxu0 0.0
        %674 = vmatprep.subr.mxu0 0.0
        %675 = vmatpush1.msra.mxu0 0.0
        %676 = vmatprep.subr.mxu0 0.0
        %677 = vmatpush1.msra.mxu0 0.0
        %678 = vmatprep.subr.mxu0 0.0
        %679 = vmatpush1.msra.mxu0 0.0
        %680 = vmatprep.subr.mxu0 0.0
        %681 = vmatpush1.msra.mxu0 0.0
        %682 = vmatprep.subr.mxu0 0.0
        %683 = vmatpush1.msra.mxu0 0.0
        %684 = vmatprep.subr.mxu0 0.0
        %685 = vmatpush1.msra.mxu0 0.0
        %686 = vmatprep.subr.mxu0 0.0
        %687 = vmatpush1.msra.mxu0 0.0
        %688 = vmatprep.subr.mxu0 0.0
        %689 = vmatpush1.msra.mxu0 0.0
        %690 = vmatprep.subr.mxu0 0.0
        %691 = vmatpush1.msra.mxu0 0.0
        %692 = vmatprep.subr.mxu0 0.0
        %693 = vmatpush1.msra.mxu0 0.0
        %694 = vmatprep.subr.mxu0 0.0
        %695 = vmatpush1.msra.mxu0 0.0
        %696 = vmatprep.subr.mxu0 0.0
        %697 = vmatpush1.msra.mxu0 0.0
        %698 = vmatprep.subr.mxu0 0.0
        %699 = vmatpush1.msra.mxu0 0.0
        %700 = vmatprep.subr.mxu0 0.0
        %701 = vmatpush1.msra.mxu0 0.0
        %702 = vmatprep.subr.mxu0 0.0
        %703 = vmatpush1.msra.mxu0 0.0
        %704 = vmatprep.subr.mxu0 0.0
        %705 = vmatpush1.msra.mxu0 0.0
        %706 = vmatprep.subr.mxu0 0.0
        %707 = vmatpush1.msra.mxu0 0.0
        %708 = vmatprep.subr.mxu0 0.0
        %709 = vmatpush1.msra.mxu0 0.0
        %710 = vmatprep.subr.mxu0 0.0
        %711 = vmatpush1.msra.mxu0 0.0
        %712 = vmatprep.subr.mxu0 0.0
        %713 = vmatpush1.msra.mxu0 0.0
        %714 = vmatprep.subr.mxu0 0.0
        %715 = vmatpush1.msra.mxu0 0.0
        %716 = vmatprep.mubr.f32.mxu0 0.0
        %717 = vmatmul.mubr.f32.gmra.mrb[0].mxu0 %v650
        %v718 = vpop.f32.mrb[0].mxu0
        %v719 = vadd.f32 %v647, %v718
        %v720 = vpop.f32.mrb[0].mxu0
        %721 = vdwg.mxu0
        %v722 = vtanh.pop %v719
        %723 = vst.msk [vmem:[%s376] sm:$0xff] %vm563, %v466
        %725 = vrot.lane.b32.xlu0 %v549, 32
        %v726 = vpop.permute.xlu0 %725
        %vm728 = vcmask 523520
        %729 = vst.msk [vmem:[%s376] sm:$0xff] %vm728, %v726
        %731 = vrot.lane.b32.xlu0 %v722, 64
        %v732 = vpop.permute.xlu0 %731
        %vm734 = vcmask 572928
        %735 = vst.msk [vmem:[%s376] sm:$0xff] %vm734, %v732
        %737 = vrot.lane.b32.xlu0 %v634, 38
        %v738 = vpop.permute.xlu0 %737
        %vm740 = vcmask 646704
        %741 = vst.msk [vmem:[%s376] sm:$0xff] %vm740, %v738
        %vm742 = vcmask 1048184
        %743 = vst.msk [vmem:[%s376] sm:$0xff] %vm742, 0.0
        %s744 = sand.u32 %s253, 1
        %s745 = scalar_lea.sflag [#allocation4], %s744
        %s746 = sand.u32 %s253, 1
        %s747 = smul.addr %s746, 8
        %s748 = scalar_lea.vmem [#allocation5], %s747
        // Predicated region
        $region65: #{tpu_custom_call.1} parent=59 // pred_check
          %p749 = pneg %p263
        $region66: #{tpu_custom_call.1} parent=59 // pred_check_branch
          %751 = sbr.rel (%p749) target = $region68
        $region67: #{tpu_custom_call.1} parent=59 // pred_region
          %s753 = ssub.s32 128, 128
          %754 = vsyncadd %s745, %s753
          %s755 = smul.addr %s25, 128
          %s756 = scalar_lea.hbm %s10, %s755
          %s758 = sshll.u32 %s748, 4
          %s759 = int_to_ptr.vmem [resolvable:$true] %s758
          %761 = dma.vmem_to_hbm [thread:$0]  %s759, 128, %s756, %s745
        $region68: #{tpu_custom_call.1} parent=59 // pred_fallthru
          _
      $region60: #{tpu_custom_call.1} parent=5 // pred_fallthru
        _
      %p762 = scmp.le.s32.totalorder 2, %s20
      // Predicated region
      $region69: #{tpu_custom_call.1} parent=5 // pred_check
        %p763 = pneg %p762
      $region70: #{tpu_custom_call.1} parent=5 // pred_check_branch
        %765 = sbr.rel (%p763) target = $region72
      $region71: #{tpu_custom_call.1} parent=5 // pred_region
        %s766 = ssub.s32 %s20, 2
        // Predicated region
        $region73: #{tpu_custom_call.1} parent=71 // pred_check
          %p767 = pneg %p269
        $region74: #{tpu_custom_call.1} parent=71 // pred_check_branch
          %769 = sbr.rel (%p767) target = $region76
        $region75: #{tpu_custom_call.1} parent=71 // pred_region
          %s770 = sand.u32 %s254, 1
          %s771 = scalar_lea.sflag [#allocation4], %s770
          %s772 = sand.u32 %s254, 1
          %s773 = smul.addr %s772, 8
          %s774 = scalar_lea.vmem [#allocation5], %s773
          %775 = dma.done %s771, 128
        $region76: #{tpu_custom_call.1} parent=71 // pred_fallthru
          _
      $region72: #{tpu_custom_call.1} parent=5 // pred_fallthru
        _
    $region6: #{tpu_custom_call.1} parent=1 // loop_footer
      %s24 = sadd.s32 1, %s20
    $region7: #{tpu_custom_call.1} parent=1 // loop_footer_branch
      %19 = sbr.rel target = $region3
    $region8: #{tpu_custom_call.1} parent=1 // loop_exit
      _
    %776 = vsyncpa [#allocation3], 1
    %s777 = scalar_lea.sflag [#allocation3], 1
    %778 = vsyncpa %s777, 1
    %779 = vsyncpa [#allocation4], 1
    %s780 = scalar_lea.sflag [#allocation4], 1
    %781 = vsyncpa %s780, 1

</llo_original>
